<compile_context>
chip_gen: v6e
topology: v6e:2x2x1
jax: 0.10.0
libtpu: 0.0.40
codegen_flags: <defaults>
</compile_context>

<pallas_src>
import functools

import jax
import jax.numpy as jnp
from jax import lax
from jax.experimental import pallas as pl
from jax.experimental.pallas import tpu as pltpu


def _swish(x):
    return x * jax.nn.sigmoid(x)


def _softplus(x):
    # numerically-stable log(1 + exp(x)), matches F.softplus semantics
    return jnp.maximum(x, 0.0) + jnp.log1p(jnp.exp(-jnp.abs(x)))


def _round_up(x, m):
    return (x + m - 1) // m * m


def forward_net_kernel(
    state_ref, act_ref,
    w1s_ref, w1a_ref, b1_ref,
    w2_ref, b2_ref, w3_ref, b3_ref, w4_ref, b4_ref,
    w5_ref, b5_ref, max_lv_ref, min_lv_ref,
    out_ref,
    *, output_size,
):
    # MXU-operand dtype (f32 or bf16); accumulation / biases / elementwise stay f32.
    cdt = w2_ref.dtype

    # Layer 1: normalization (x - mu)/sigma already folded into W1/b1; W1 is split
    # into state / act halves so no XLA-side concat is needed.
    h = jnp.dot(state_ref[...].astype(cdt), w1s_ref[...],
                preferred_element_type=jnp.float32)
    h = h + jnp.dot(act_ref[...].astype(cdt), w1a_ref[...],
                    preferred_element_type=jnp.float32)
    h = _swish(h + b1_ref[...])
    h = _swish(jnp.dot(h.astype(cdt), w2_ref[...],
                       preferred_element_type=jnp.float32) + b2_ref[...])
    h = _swish(jnp.dot(h.astype(cdt), w3_ref[...],
                       preferred_element_type=jnp.float32) + b3_ref[...])
    h = _swish(jnp.dot(h.astype(cdt), w4_ref[...],
                       preferred_element_type=jnp.float32) + b4_ref[...])

    # Fused final layer into a single 128-lane slab:
    #   lanes [0, output_size)            -> mean
    #   lanes [output_size, 2*output_size) -> log_var (clamped below)
    y = jnp.dot(h.astype(cdt), w5_ref[...],
                preferred_element_type=jnp.float32) + b5_ref[...]

    max_lv = max_lv_ref[...]
    min_lv = min_lv_ref[...]
    lv = max_lv - _softplus(max_lv - y)
    lv = min_lv + _softplus(lv - min_lv)

    # One cheap VPU select puts the un-clamped mean lanes back; padded lanes hold
    # garbage but are never read by the wrapper.
    lane = lax.broadcasted_iota(jnp.int32, y.shape, 1)
    out = jnp.where(lane >= output_size, lv, y)

    # Single unmasked, 128-lane-aligned store (f32 or bf16).
    out_ref[...] = out.astype(out_ref.dtype)


def init_forward_net_params(key, input_size, output_size, hidden_size):
    """Xavier-normal weights, zero biases; mu/sigma/log_var bounds as in __init__."""
    dims = [input_size, hidden_size, hidden_size, hidden_size, hidden_size,
            2 * output_size]
    params = {}
    keys = jax.random.split(key, len(dims) - 1)
    for i, (fan_in, fan_out) in enumerate(zip(dims[:-1], dims[1:])):
        std = (2.0 / (fan_in + fan_out)) ** 0.5
        params[f"w{i + 1}"] = std * jax.random.normal(
            keys[i], (fan_in, fan_out), dtype=jnp.float32)
        params[f"b{i + 1}"] = jnp.zeros((1, fan_out), dtype=jnp.float32)
    params["mu"] = jnp.zeros((1, input_size), dtype=jnp.float32)
    params["sigma"] = jnp.ones((1, input_size), dtype=jnp.float32)
    params["max_log_var"] = jnp.full((1, output_size), 0.5, dtype=jnp.float32)
    params["min_log_var"] = jnp.full((1, output_size), -10.0, dtype=jnp.float32)
    return params


@functools.partial(
    jax.jit,
    static_argnames=("output_size", "return_var", "block_rows", "matmul_dtype",
                     "out_dtype"))
def forward_net_forward(params, state, act, *, output_size, return_var=False,
                        block_rows=1024, matmul_dtype=jnp.bfloat16,
                        out_dtype=None):
    if out_dtype is None:
        out_dtype = matmul_dtype

    # TODO(synk): env_spec.state_preproc is environment-specific and not defined
    # in the module; identity preprocessing is used here.
    state = state.astype(jnp.float32)
    act = act.astype(jnp.float32)
    batch, state_dim = state.shape
    _, act_dim = act.shape
    input_size = state_dim + act_dim
    hidden = params["w1"].shape[1]
    assert params["w1"].shape[0] == input_size
    # Single 128-lane output slab requires both halves to fit in one vreg width.
    assert 2 * output_size <= 128
    out_cols = 128

    # ---- fold input normalization (x - mu)/sigma into layer 1, split by input ----
    # (x - mu)/sigma @ W1 + b1  ==  x @ (diag(1/sigma) W1) + (b1 - (mu/sigma) @ W1)
    # NOTE: if sigma can have very small entries, consider clamping it before the
    # fold when casting the folded W1 to bf16.
    inv_sigma = 1.0 / params["sigma"]                        # (1, in)
    w1n = params["w1"] * inv_sigma.reshape(-1, 1)            # (in, hidden)
    b1n = params["b1"] - (params["mu"] * inv_sigma) @ params["w1"]
    w1s = w1n[:state_dim]                                    # (state_dim, hidden)
    w1a = w1n[state_dim:]                                    # (act_dim, hidden)

    # ---- fused final layer, zero-padded to one 128-lane slab ----
    # torch layout already has mean cols [0, out) and log_var cols [out, 2*out).
    w5p = jnp.zeros((hidden, out_cols), jnp.float32).at[:, :2 * output_size].set(
        params["w5"])
    b5p = jnp.zeros((1, out_cols), jnp.float32).at[:, :2 * output_size].set(
        params["b5"])
    max_lv = jnp.zeros((1, out_cols), jnp.float32).at[
        :, output_size:2 * output_size].set(params["max_log_var"])
    min_lv = jnp.zeros((1, out_cols), jnp.float32).at[
        :, output_size:2 * output_size].set(params["min_log_var"])

    # ---- batch tiling: bm multiple of 16, grid >= ~4 steps when batch allows ----
    # (restores DMA/compute overlap; lets "parallel" shard across v7x's two TCs)
    min_steps = 4
    block_rows = max(16, _round_up(int(block_rows), 16))
    bm = max(16, min(block_rows, _round_up((batch + min_steps - 1) // min_steps, 16)))
    batch_pad = _round_up(batch, bm)
    if batch_pad != batch:
        state = jnp.pad(state, ((0, batch_pad - batch), (0, 0)))
        act = jnp.pad(act, ((0, batch_pad - batch), (0, 0)))
    grid = (batch_pad // bm,)

    # ---- MXU operand dtype (weights); activations are cast in-kernel ----
    w1s = w1s.astype(matmul_dtype)
    w1a = w1a.astype(matmul_dtype)
    w2 = params["w2"].astype(matmul_dtype)
    w3 = params["w3"].astype(matmul_dtype)
    w4 = params["w4"].astype(matmul_dtype)
    w5p = w5p.astype(matmul_dtype)

    const = lambda shape: pl.BlockSpec(shape, lambda i: (0, 0))
    in_specs = [
        pl.BlockSpec((bm, state_dim), lambda i: (i, 0)),        # state tile (f32)
        pl.BlockSpec((bm, act_dim), lambda i: (i, 0)),          # act tile   (f32)
        const((state_dim, hidden)), const((act_dim, hidden)),   # W1 split (folded)
        const((1, hidden)),                                     # b1 (folded)
        const((hidden, hidden)), const((1, hidden)),            # w2, b2
        const((hidden, hidden)), const((1, hidden)),            # w3, b3
        const((hidden, hidden)), const((1, hidden)),            # w4, b4
        const((hidden, out_cols)), const((1, out_cols)),        # w5 slab, b5 slab
        const((1, out_cols)),                                   # max_log_var slab
        const((1, out_cols)),                                   # min_log_var slab
    ]
    # If profiling shows the output-store DMA exposed behind the tiny compute,
    # add pipeline_mode=pl.Buffered(3) here.
    out_specs = pl.BlockSpec((bm, out_cols), lambda i: (i, 0))

    # ---- advisory cost estimate for XLA's scheduler ----
    itemsize_w = jnp.dtype(matmul_dtype).itemsize
    itemsize_out = jnp.dtype(out_dtype).itemsize
    flops = 2 * batch_pad * (input_size * hidden + 3 * hidden * hidden
                             + hidden * out_cols)
    transcendentals = batch_pad * (4 * hidden + 2 * out_cols)
    weight_bytes = itemsize_w * (input_size * hidden + 3 * hidden * hidden
                                 + hidden * out_cols)
    bytes_accessed = (4 * batch_pad * input_size
                      + itemsize_out * batch_pad * out_cols
                      + weight_bytes)
    cost = pl.CostEstimate(flops=flops, transcendentals=transcendentals,
                           bytes_accessed=bytes_accessed)

    out = pl.pallas_call(
        functools.partial(forward_net_kernel, output_size=output_size),
        out_shape=jax.ShapeDtypeStruct((batch_pad, out_cols), out_dtype),
        grid_spec=pltpu.PrefetchScalarGridSpec(
            num_scalar_prefetch=0,
            grid=grid,
            in_specs=in_specs,
            out_specs=out_specs,
        ),
        compiler_params=pltpu.CompilerParams(
            dimension_semantics=("parallel",),
            vmem_limit_bytes=32 * 1024 * 1024,
        ),
        cost_estimate=cost,
    )(state, act, w1s, w1a, b1n, w2, params["b2"], w3, params["b3"],
      w4, params["b4"], w5p, b5p, max_lv, min_lv)

    mean = out[:batch, :output_size]
    log_var = out[:batch, output_size:2 * output_size]
    if return_var:
        return mean, log_var
    return mean


def _reference_forward(params, state, act, output_size):
    """Pure-JAX reference matching the torch module semantics."""
    comb = jnp.concatenate([state, act], axis=-1)
    x = (comb - params["mu"]) / params["sigma"]
    for i in range(1, 5):
        x = x @ params[f"w{i}"] + params[f"b{i}"]
        x = x * jax.nn.sigmoid(x)
    x = x @ params["w5"] + params["b5"]
    mean, log_var = x[:, :output_size], x[:, output_size:]
    log_var = params["max_log_var"] - jax.nn.softplus(params["max_log_var"] - log_var)
    log_var = params["min_log_var"] + jax.nn.softplus(log_var - params["min_log_var"])
    return mean, log_var


if __name__ == "__main__":
    # shapes consistent with the module: state dim 12, action dim 4
    state_size = 12
    act_size = 4
    input_size = state_size + act_size   # 16
    output_size = state_size             # 12 (next-state delta prediction)
    hidden_size = 32

    key = jax.random.PRNGKey(0)
    kp, ks, ka, ks2, ka2 = jax.random.split(key, 5)
    params = init_forward_net_params(kp, input_size, output_size, hidden_size)

    # --- small batch, full-f32 path: tight check against the reference ---
    batch = 8
    state = jax.random.normal(ks, (batch, state_size), dtype=jnp.float32)
    act = jax.random.normal(ka, (batch, act_size), dtype=jnp.float32)
    mean, log_var = forward_net_forward(
        params, state, act, output_size=output_size, return_var=True,
        matmul_dtype=jnp.float32, out_dtype=jnp.float32)
    mean = jax.block_until_ready(mean)
    log_var = jax.block_until_ready(log_var)
    ref_mean, ref_log_var = _reference_forward(params, state, act, output_size)
    assert jnp.allclose(mean, ref_mean, atol=1e-4, rtol=1e-4)
    assert jnp.allclose(log_var, ref_log_var, atol=1e-4, rtol=1e-4)

    # --- non-multiple batch, multi-step grid, default bf16 MXU operands + bf16 out ---
    batch2 = 300
    state2 = jax.random.normal(ks2, (batch2, state_size), dtype=jnp.float32)
    act2 = jax.random.normal(ka2, (batch2, act_size), dtype=jnp.float32)
    mean2, log_var2 = forward_net_forward(
        params, state2, act2, output_size=output_size, return_var=True)
    mean2 = jax.block_until_ready(mean2)
    log_var2 = jax.block_until_ready(log_var2)
    ref_mean2, ref_log_var2 = _reference_forward(params, state2, act2, output_size)
    # bf16 operands + bf16 output -> loose tolerance vs the full-f32 reference
    assert jnp.allclose(mean2.astype(jnp.float32), ref_mean2, atol=1e-1, rtol=1e-1)
    assert jnp.allclose(log_var2.astype(jnp.float32), ref_log_var2, atol=1e-1, rtol=1e-1)

    print("KERNEL_OK")
</pallas_src>

<mosaic_0001>
module attributes {stable_mosaic.version = 11 : i64} {
  func.func @forward_net_kernel(%arg0: i32, %arg1: memref<16x12xf32, #tpu.memory_space<vmem>>, %arg2: memref<16x4xf32, #tpu.memory_space<vmem>>, %arg3: memref<12x32xf32, #tpu.memory_space<vmem>>, %arg4: memref<4x32xf32, #tpu.memory_space<vmem>>, %arg5: memref<1x32xf32, #tpu.memory_space<vmem>>, %arg6: memref<32x32xf32, #tpu.memory_space<vmem>>, %arg7: memref<1x32xf32, #tpu.memory_space<vmem>>, %arg8: memref<32x32xf32, #tpu.memory_space<vmem>>, %arg9: memref<1x32xf32, #tpu.memory_space<vmem>>, %arg10: memref<32x32xf32, #tpu.memory_space<vmem>>, %arg11: memref<1x32xf32, #tpu.memory_space<vmem>>, %arg12: memref<32x128xf32, #tpu.memory_space<vmem>>, %arg13: memref<1x128xf32, #tpu.memory_space<vmem>>, %arg14: memref<1x128xf32, #tpu.memory_space<vmem>>, %arg15: memref<1x128xf32, #tpu.memory_space<vmem>>, %arg16: memref<16x128xf32, #tpu.memory_space<vmem>>) attributes {dimension_semantics = [#tpu.dimension_semantics<parallel>], iteration_bounds = array<i64: 1>, scalar_prefetch = 0 : i64, scratch_operands = 0 : i64, tpu.core_type = #tpu.core_type<tc>, window_params = [{transform_indices = @transform_0, window_bounds = array<i64: 16, 12>}, {transform_indices = @transform_1, window_bounds = array<i64: 16, 4>}, {pipeline_mode = #tpu.pipeline_mode<synchronous>, transform_indices = @transform_2, window_bounds = array<i64: 12, 32>}, {pipeline_mode = #tpu.pipeline_mode<synchronous>, transform_indices = @transform_3, window_bounds = array<i64: 4, 32>}, {pipeline_mode = #tpu.pipeline_mode<synchronous>, transform_indices = @transform_4, window_bounds = array<i64: 1, 32>}, {pipeline_mode = #tpu.pipeline_mode<synchronous>, transform_indices = @transform_5, window_bounds = array<i64: 32, 32>}, {pipeline_mode = #tpu.pipeline_mode<synchronous>, transform_indices = @transform_6, window_bounds = array<i64: 1, 32>}, {pipeline_mode = #tpu.pipeline_mode<synchronous>, transform_indices = @transform_7, window_bounds = array<i64: 32, 32>}, {pipeline_mode = #tpu.pipeline_mode<synchronous>, transform_indices = @transform_8, window_bounds = array<i64: 1, 32>}, {pipeline_mode = #tpu.pipeline_mode<synchronous>, transform_indices = @transform_9, window_bounds = array<i64: 32, 32>}, {pipeline_mode = #tpu.pipeline_mode<synchronous>, transform_indices = @transform_10, window_bounds = array<i64: 1, 32>}, {pipeline_mode = #tpu.pipeline_mode<synchronous>, transform_indices = @transform_11, window_bounds = array<i64: 32, 128>}, {pipeline_mode = #tpu.pipeline_mode<synchronous>, transform_indices = @transform_12, window_bounds = array<i64: 1, 128>}, {pipeline_mode = #tpu.pipeline_mode<synchronous>, transform_indices = @transform_13, window_bounds = array<i64: 1, 128>}, {pipeline_mode = #tpu.pipeline_mode<synchronous>, transform_indices = @transform_14, window_bounds = array<i64: 1, 128>}, {transform_indices = @transform_15, window_bounds = array<i64: 16, 128>}]} {
    %c0 = arith.constant 0 : index
    %c0_0 = arith.constant 0 : index
    %0 = vector.load %arg1[%c0, %c0_0] : memref<16x12xf32, #tpu.memory_space<vmem>>, vector<16x12xf32>
    %c0_1 = arith.constant 0 : index
    %c0_2 = arith.constant 0 : index
    %1 = vector.load %arg3[%c0_1, %c0_2] : memref<12x32xf32, #tpu.memory_space<vmem>>, vector<12x32xf32>
    %cst = arith.constant dense<0.000000e+00> : vector<16x32xf32>
    %2 = tpu.matmul %0, %1, %cst {dimension_numbers = #tpu.dot_dimension_numbers<[1], [0], [0], [1], [0, 0, 1, 1], [], []>} : vector<16x12xf32>, vector<12x32xf32>, vector<16x32xf32> -> vector<16x32xf32>
    %c0_3 = arith.constant 0 : index
    %c0_4 = arith.constant 0 : index
    %3 = vector.load %arg2[%c0_3, %c0_4] : memref<16x4xf32, #tpu.memory_space<vmem>>, vector<16x4xf32>
    %c0_5 = arith.constant 0 : index
    %c0_6 = arith.constant 0 : index
    %4 = vector.load %arg4[%c0_5, %c0_6] : memref<4x32xf32, #tpu.memory_space<vmem>>, vector<4x32xf32>
    %cst_7 = arith.constant dense<0.000000e+00> : vector<16x32xf32>
    %5 = tpu.matmul %3, %4, %cst_7 {dimension_numbers = #tpu.dot_dimension_numbers<[1], [0], [0], [1], [0, 0, 1, 1], [], []>} : vector<16x4xf32>, vector<4x32xf32>, vector<16x32xf32> -> vector<16x32xf32>
    %6 = arith.addf %2, %5 : vector<16x32xf32>
    %c0_8 = arith.constant 0 : index
    %c0_9 = arith.constant 0 : index
    %7 = vector.load %arg5[%c0_8, %c0_9] : memref<1x32xf32, #tpu.memory_space<vmem>>, vector<1x32xf32>
    %8 = vector.broadcast %7 : vector<1x32xf32> to vector<16x32xf32>
    %9 = arith.addf %6, %8 : vector<16x32xf32>
    %10 = arith.negf %9 : vector<16x32xf32>
    %11 = math.exp %10 : vector<16x32xf32>
    %cst_10 = arith.constant 1.000000e+00 : f32
    %12 = vector.broadcast %cst_10 : f32 to vector<16x32xf32>
    %13 = arith.addf %12, %11 : vector<16x32xf32>
    %14 = arith.divf %12, %13 : vector<16x32xf32>
    %15 = arith.mulf %9, %14 : vector<16x32xf32>
    %c0_11 = arith.constant 0 : index
    %c0_12 = arith.constant 0 : index
    %16 = vector.load %arg6[%c0_11, %c0_12] : memref<32x32xf32, #tpu.memory_space<vmem>>, vector<32x32xf32>
    %cst_13 = arith.constant dense<0.000000e+00> : vector<16x32xf32>
    %17 = tpu.matmul %15, %16, %cst_13 {dimension_numbers = #tpu.dot_dimension_numbers<[1], [0], [0], [1], [0, 0, 1, 1], [], []>} : vector<16x32xf32>, vector<32x32xf32>, vector<16x32xf32> -> vector<16x32xf32>
    %c0_14 = arith.constant 0 : index
    %c0_15 = arith.constant 0 : index
    %18 = vector.load %arg7[%c0_14, %c0_15] : memref<1x32xf32, #tpu.memory_space<vmem>>, vector<1x32xf32>
    %19 = vector.broadcast %18 : vector<1x32xf32> to vector<16x32xf32>
    %20 = arith.addf %17, %19 : vector<16x32xf32>
    %21 = arith.negf %20 : vector<16x32xf32>
    %22 = math.exp %21 : vector<16x32xf32>
    %cst_16 = arith.constant 1.000000e+00 : f32
    %23 = vector.broadcast %cst_16 : f32 to vector<16x32xf32>
    %24 = arith.addf %23, %22 : vector<16x32xf32>
    %25 = arith.divf %23, %24 : vector<16x32xf32>
    %26 = arith.mulf %20, %25 : vector<16x32xf32>
    %c0_17 = arith.constant 0 : index
    %c0_18 = arith.constant 0 : index
    %27 = vector.load %arg8[%c0_17, %c0_18] : memref<32x32xf32, #tpu.memory_space<vmem>>, vector<32x32xf32>
    %cst_19 = arith.constant dense<0.000000e+00> : vector<16x32xf32>
    %28 = tpu.matmul %26, %27, %cst_19 {dimension_numbers = #tpu.dot_dimension_numbers<[1], [0], [0], [1], [0, 0, 1, 1], [], []>} : vector<16x32xf32>, vector<32x32xf32>, vector<16x32xf32> -> vector<16x32xf32>
    %c0_20 = arith.constant 0 : index
    %c0_21 = arith.constant 0 : index
    %29 = vector.load %arg9[%c0_20, %c0_21] : memref<1x32xf32, #tpu.memory_space<vmem>>, vector<1x32xf32>
    %30 = vector.broadcast %29 : vector<1x32xf32> to vector<16x32xf32>
    %31 = arith.addf %28, %30 : vector<16x32xf32>
    %32 = arith.negf %31 : vector<16x32xf32>
    %33 = math.exp %32 : vector<16x32xf32>
    %cst_22 = arith.constant 1.000000e+00 : f32
    %34 = vector.broadcast %cst_22 : f32 to vector<16x32xf32>
    %35 = arith.addf %34, %33 : vector<16x32xf32>
    %36 = arith.divf %34, %35 : vector<16x32xf32>
    %37 = arith.mulf %31, %36 : vector<16x32xf32>
    %c0_23 = arith.constant 0 : index
    %c0_24 = arith.constant 0 : index
    %38 = vector.load %arg10[%c0_23, %c0_24] : memref<32x32xf32, #tpu.memory_space<vmem>>, vector<32x32xf32>
    %cst_25 = arith.constant dense<0.000000e+00> : vector<16x32xf32>
    %39 = tpu.matmul %37, %38, %cst_25 {dimension_numbers = #tpu.dot_dimension_numbers<[1], [0], [0], [1], [0, 0, 1, 1], [], []>} : vector<16x32xf32>, vector<32x32xf32>, vector<16x32xf32> -> vector<16x32xf32>
    %c0_26 = arith.constant 0 : index
    %c0_27 = arith.constant 0 : index
    %40 = vector.load %arg11[%c0_26, %c0_27] : memref<1x32xf32, #tpu.memory_space<vmem>>, vector<1x32xf32>
    %41 = vector.broadcast %40 : vector<1x32xf32> to vector<16x32xf32>
    %42 = arith.addf %39, %41 : vector<16x32xf32>
    %43 = arith.negf %42 : vector<16x32xf32>
    %44 = math.exp %43 : vector<16x32xf32>
    %cst_28 = arith.constant 1.000000e+00 : f32
    %45 = vector.broadcast %cst_28 : f32 to vector<16x32xf32>
    %46 = arith.addf %45, %44 : vector<16x32xf32>
    %47 = arith.divf %45, %46 : vector<16x32xf32>
    %48 = arith.mulf %42, %47 : vector<16x32xf32>
    %c0_29 = arith.constant 0 : index
    %c0_30 = arith.constant 0 : index
    %49 = vector.load %arg12[%c0_29, %c0_30] : memref<32x128xf32, #tpu.memory_space<vmem>>, vector<32x128xf32>
    %cst_31 = arith.constant dense<0.000000e+00> : vector<16x128xf32>
    %50 = tpu.matmul %48, %49, %cst_31 {dimension_numbers = #tpu.dot_dimension_numbers<[1], [0], [0], [1], [0, 0, 1, 1], [], []>} : vector<16x32xf32>, vector<32x128xf32>, vector<16x128xf32> -> vector<16x128xf32>
    %c0_32 = arith.constant 0 : index
    %c0_33 = arith.constant 0 : index
    %51 = vector.load %arg13[%c0_32, %c0_33] : memref<1x128xf32, #tpu.memory_space<vmem>>, vector<1x128xf32>
    %52 = vector.broadcast %51 : vector<1x128xf32> to vector<16x128xf32>
    %53 = arith.addf %50, %52 : vector<16x128xf32>
    %c0_34 = arith.constant 0 : index
    %c0_35 = arith.constant 0 : index
    %54 = vector.load %arg14[%c0_34, %c0_35] : memref<1x128xf32, #tpu.memory_space<vmem>>, vector<1x128xf32>
    %c0_36 = arith.constant 0 : index
    %c0_37 = arith.constant 0 : index
    %55 = vector.load %arg15[%c0_36, %c0_37] : memref<1x128xf32, #tpu.memory_space<vmem>>, vector<1x128xf32>
    %56 = vector.broadcast %54 : vector<1x128xf32> to vector<16x128xf32>
    %57 = arith.subf %56, %53 : vector<16x128xf32>
    %cst_38 = arith.constant 0.000000e+00 : f32
    %58 = vector.broadcast %cst_38 : f32 to vector<16x128xf32>
    %59 = arith.maximumf %57, %58 : vector<16x128xf32>
    %60 = math.absf %57 : vector<16x128xf32>
    %cst_39 = arith.constant 0.000000e+00 : f32
    %61 = vector.broadcast %cst_39 : f32 to vector<16x128xf32>
    %62 = arith.subf %61, %60 : vector<16x128xf32>
    %63 = math.exp %62 : vector<16x128xf32>
    %64 = math.log1p %63 : vector<16x128xf32>
    %65 = arith.addf %59, %64 : vector<16x128xf32>
    %66 = vector.broadcast %54 : vector<1x128xf32> to vector<16x128xf32>
    %67 = arith.subf %66, %65 : vector<16x128xf32>
    %68 = vector.broadcast %55 : vector<1x128xf32> to vector<16x128xf32>
    %69 = arith.subf %67, %68 : vector<16x128xf32>
    %cst_40 = arith.constant 0.000000e+00 : f32
    %70 = vector.broadcast %cst_40 : f32 to vector<16x128xf32>
    %71 = arith.maximumf %69, %70 : vector<16x128xf32>
    %72 = math.absf %69 : vector<16x128xf32>
    %cst_41 = arith.constant 0.000000e+00 : f32
    %73 = vector.broadcast %cst_41 : f32 to vector<16x128xf32>
    %74 = arith.subf %73, %72 : vector<16x128xf32>
    %75 = math.exp %74 : vector<16x128xf32>
    %76 = math.log1p %75 : vector<16x128xf32>
    %77 = arith.addf %71, %76 : vector<16x128xf32>
    %78 = vector.broadcast %55 : vector<1x128xf32> to vector<16x128xf32>
    %79 = arith.addf %78, %77 : vector<16x128xf32>
    %80 = tpu.iota {dimensions = array<i32: 1>} : vector<16x128xi32>
    %c12_i32 = arith.constant 12 : i32
    %81 = vector.broadcast %c12_i32 : i32 to vector<16x128xi32>
    %82 = arith.cmpi sge, %80, %81 : vector<16x128xi32>
    %83 = arith.select %82, %79, %53 : vector<16x128xi1>, vector<16x128xf32>
    %c0_42 = arith.constant 0 : index
    %c0_43 = arith.constant 0 : index
    %84 = vector.load %arg16[%c0_42, %c0_43] : memref<16x128xf32, #tpu.memory_space<vmem>>, vector<16x128xf32>
    tpu.vector_store %arg16[%c0_42, %c0_43], %83 {strides = array<i32>} : memref<16x128xf32, #tpu.memory_space<vmem>>, vector<16x128xf32>,
    return
  }
  func.func @transform_0(%arg0: i32) -> (i32, i32) {
    %c0_i32 = arith.constant 0 : i32
    %c0_i32_0 = arith.constant 0 : i32
    return %arg0, %c0_i32 : i32, i32
  }
  func.func @transform_1(%arg0: i32) -> (i32, i32) {
    %c0_i32 = arith.constant 0 : i32
    %c0_i32_0 = arith.constant 0 : i32
    return %arg0, %c0_i32 : i32, i32
  }
  func.func @transform_2(%arg0: i32) -> (i32, i32) {
    %c0_i32 = arith.constant 0 : i32
    %c0_i32_0 = arith.constant 0 : i32
    %c0_i32_1 = arith.constant 0 : i32
    return %c0_i32, %c0_i32_0 : i32, i32
  }
  func.func @transform_3(%arg0: i32) -> (i32, i32) {
    %c0_i32 = arith.constant 0 : i32
    %c0_i32_0 = arith.constant 0 : i32
    %c0_i32_1 = arith.constant 0 : i32
    return %c0_i32, %c0_i32_0 : i32, i32
  }
  func.func @transform_4(%arg0: i32) -> (i32, i32) {
    %c0_i32 = arith.constant 0 : i32
    %c0_i32_0 = arith.constant 0 : i32
    %c0_i32_1 = arith.constant 0 : i32
    return %c0_i32, %c0_i32_0 : i32, i32
  }
  func.func @transform_5(%arg0: i32) -> (i32, i32) {
    %c0_i32 = arith.constant 0 : i32
    %c0_i32_0 = arith.constant 0 : i32
    %c0_i32_1 = arith.constant 0 : i32
    return %c0_i32, %c0_i32_0 : i32, i32
  }
  func.func @transform_6(%arg0: i32) -> (i32, i32) {
    %c0_i32 = arith.constant 0 : i32
    %c0_i32_0 = arith.constant 0 : i32
    %c0_i32_1 = arith.constant 0 : i32
    return %c0_i32, %c0_i32_0 : i32, i32
  }
  func.func @transform_7(%arg0: i32) -> (i32, i32) {
    %c0_i32 = arith.constant 0 : i32
    %c0_i32_0 = arith.constant 0 : i32
    %c0_i32_1 = arith.constant 0 : i32
    return %c0_i32, %c0_i32_0 : i32, i32
  }
  func.func @transform_8(%arg0: i32) -> (i32, i32) {
    %c0_i32 = arith.constant 0 : i32
    %c0_i32_0 = arith.constant 0 : i32
    %c0_i32_1 = arith.constant 0 : i32
    return %c0_i32, %c0_i32_0 : i32, i32
  }
  func.func @transform_9(%arg0: i32) -> (i32, i32) {
    %c0_i32 = arith.constant 0 : i32
    %c0_i32_0 = arith.constant 0 : i32
    %c0_i32_1 = arith.constant 0 : i32
    return %c0_i32, %c0_i32_0 : i32, i32
  }
  func.func @transform_10(%arg0: i32) -> (i32, i32) {
    %c0_i32 = arith.constant 0 : i32
    %c0_i32_0 = arith.constant 0 : i32
    %c0_i32_1 = arith.constant 0 : i32
    return %c0_i32, %c0_i32_0 : i32, i32
  }
  func.func @transform_11(%arg0: i32) -> (i32, i32) {
    %c0_i32 = arith.constant 0 : i32
    %c0_i32_0 = arith.constant 0 : i32
    %c0_i32_1 = arith.constant 0 : i32
    return %c0_i32, %c0_i32_0 : i32, i32
  }
  func.func @transform_12(%arg0: i32) -> (i32, i32) {
    %c0_i32 = arith.constant 0 : i32
    %c0_i32_0 = arith.constant 0 : i32
    %c0_i32_1 = arith.constant 0 : i32
    return %c0_i32, %c0_i32_0 : i32, i32
  }
  func.func @transform_13(%arg0: i32) -> (i32, i32) {
    %c0_i32 = arith.constant 0 : i32
    %c0_i32_0 = arith.constant 0 : i32
    %c0_i32_1 = arith.constant 0 : i32
    return %c0_i32, %c0_i32_0 : i32, i32
  }
  func.func @transform_14(%arg0: i32) -> (i32, i32) {
    %c0_i32 = arith.constant 0 : i32
    %c0_i32_0 = arith.constant 0 : i32
    %c0_i32_1 = arith.constant 0 : i32
    return %c0_i32, %c0_i32_0 : i32, i32
  }
  func.func @transform_15(%arg0: i32) -> (i32, i32) {
    %c0_i32 = arith.constant 0 : i32
    %c0_i32_0 = arith.constant 0 : i32
    return %arg0, %c0_i32 : i32, i32
  }
}

</mosaic_0001>

<llo_original>
// kernel: forward_net_forward.1
$region0: #{forward_net_forward.1}
  #allocation0 [shape = 'u32[]', space=smem, size = 0x4, offset = 0x4, fixed_abs, tag = 'smem constant byte address 0x4 - core index']
  #allocation1 [shape = 'u32[144,128]{1,0:T(1,128)}', space=vmem, size = 0x12000, scoped, tag = 'internal scratch']
  %s0 = inlined_call_operand.vmem [shape: f32[16,12], index: 0, kind: input, shape index: {}]
  %s1 = inlined_call_operand.vmem [shape: f32[16,4], index: 1, kind: input, shape index: {}]
  %s2 = inlined_call_operand.vmem [shape: f32[12,32], index: 2, kind: input, shape index: {}]
  %s3 = inlined_call_operand.vmem [shape: f32[4,32], index: 3, kind: input, shape index: {}]
  %s4 = inlined_call_operand.vmem [shape: f32[1,32], index: 4, kind: input, shape index: {}]
  %s5 = inlined_call_operand.vmem [shape: f32[32,32], index: 5, kind: input, shape index: {}]
  %s6 = inlined_call_operand.vmem [shape: f32[1,32], index: 6, kind: input, shape index: {}]
  %s7 = inlined_call_operand.vmem [shape: f32[32,32], index: 7, kind: input, shape index: {}]
  %s8 = inlined_call_operand.vmem [shape: f32[1,32], index: 8, kind: input, shape index: {}]
  %s9 = inlined_call_operand.vmem [shape: f32[32,32], index: 9, kind: input, shape index: {}]
  %s10 = inlined_call_operand.vmem [shape: f32[1,32], index: 10, kind: input, shape index: {}]
  %s11 = inlined_call_operand.vmem [shape: f32[32,128], index: 11, kind: input, shape index: {}]
  %s12 = inlined_call_operand.vmem [shape: f32[1,128], index: 12, kind: input, shape index: {}]
  %s13 = inlined_call_operand.vmem [shape: f32[1,128], index: 13, kind: input, shape index: {}]
  %s14 = inlined_call_operand.vmem [shape: f32[1,128], index: 14, kind: input, shape index: {}]
  %s15 = inlined_call_operand.vmem [shape: f32[16,128], index: 15, kind: output, shape index: {}]
  %s16 = sld [smem:[#allocation0]]
  $region70: #{forward_net_forward.1} parent=0
    _
  %s18 = ssub.s32 1, %s16
  %s19 = scalar_select 0, %s18, %s16
  // Predicated region
  $region2: #{forward_net_forward.1} parent=0 // pred_check
    _
  $region3: #{forward_net_forward.1} parent=0 // pred_check_branch
    %21 = sbr.rel (0) target = $region5
  $region4: #{forward_net_forward.1} parent=0 // pred_region
    _
  $region5: #{forward_net_forward.1} parent=0 // pred_fallthru
    _
  // Predicated region
  $region6: #{forward_net_forward.1} parent=0 // pred_check
    _
  $region7: #{forward_net_forward.1} parent=0 // pred_check_branch
    %23 = sbr.rel (0) target = $region9
  $region8: #{forward_net_forward.1} parent=0 // pred_region
    _
  $region9: #{forward_net_forward.1} parent=0 // pred_fallthru
    _
  // Predicated region
  $region10: #{forward_net_forward.1} parent=0 // pred_check
    _
  $region11: #{forward_net_forward.1} parent=0 // pred_check_branch
    %25 = sbr.rel (0) target = $region13
  $region12: #{forward_net_forward.1} parent=0 // pred_region
    _
  $region13: #{forward_net_forward.1} parent=0 // pred_fallthru
    _
  // Predicated region
  $region14: #{forward_net_forward.1} parent=0 // pred_check
    _
  $region15: #{forward_net_forward.1} parent=0 // pred_check_branch
    %27 = sbr.rel (0) target = $region17
  $region16: #{forward_net_forward.1} parent=0 // pred_region
    _
  $region17: #{forward_net_forward.1} parent=0 // pred_fallthru
    _
  // Predicated region
  $region18: #{forward_net_forward.1} parent=0 // pred_check
    _
  $region19: #{forward_net_forward.1} parent=0 // pred_check_branch
    %29 = sbr.rel (0) target = $region21
  $region20: #{forward_net_forward.1} parent=0 // pred_region
    _
  $region21: #{forward_net_forward.1} parent=0 // pred_fallthru
    _
  // Predicated region
  $region22: #{forward_net_forward.1} parent=0 // pred_check
    _
  $region23: #{forward_net_forward.1} parent=0 // pred_check_branch
    %31 = sbr.rel (0) target = $region25
  $region24: #{forward_net_forward.1} parent=0 // pred_region
    _
  $region25: #{forward_net_forward.1} parent=0 // pred_fallthru
    _
  // Predicated region
  $region26: #{forward_net_forward.1} parent=0 // pred_check
    _
  $region27: #{forward_net_forward.1} parent=0 // pred_check_branch
    %33 = sbr.rel (0) target = $region29
  $region28: #{forward_net_forward.1} parent=0 // pred_region
    _
  $region29: #{forward_net_forward.1} parent=0 // pred_fallthru
    _
  // Predicated region
  $region30: #{forward_net_forward.1} parent=0 // pred_check
    _
  $region31: #{forward_net_forward.1} parent=0 // pred_check_branch
    %35 = sbr.rel (0) target = $region33
  $region32: #{forward_net_forward.1} parent=0 // pred_region
    _
  $region33: #{forward_net_forward.1} parent=0 // pred_fallthru
    _
  // Predicated region
  $region34: #{forward_net_forward.1} parent=0 // pred_check
    _
  $region35: #{forward_net_forward.1} parent=0 // pred_check_branch
    %37 = sbr.rel (0) target = $region37
  $region36: #{forward_net_forward.1} parent=0 // pred_region
    _
  $region37: #{forward_net_forward.1} parent=0 // pred_fallthru
    _
  // Predicated region
  $region38: #{forward_net_forward.1} parent=0 // pred_check
    _
  $region39: #{forward_net_forward.1} parent=0 // pred_check_branch
    %39 = sbr.rel (0) target = $region41
  $region40: #{forward_net_forward.1} parent=0 // pred_region
    _
  $region41: #{forward_net_forward.1} parent=0 // pred_fallthru
    _
  // Predicated region
  $region42: #{forward_net_forward.1} parent=0 // pred_check
    _
  $region43: #{forward_net_forward.1} parent=0 // pred_check_branch
    %41 = sbr.rel (0) target = $region45
  $region44: #{forward_net_forward.1} parent=0 // pred_region
    _
  $region45: #{forward_net_forward.1} parent=0 // pred_fallthru
    _
  // Predicated region
  $region46: #{forward_net_forward.1} parent=0 // pred_check
    _
  $region47: #{forward_net_forward.1} parent=0 // pred_check_branch
    %43 = sbr.rel (0) target = $region49
  $region48: #{forward_net_forward.1} parent=0 // pred_region
    _
  $region49: #{forward_net_forward.1} parent=0 // pred_fallthru
    _
  // Predicated region
  $region50: #{forward_net_forward.1} parent=0 // pred_check
    _
  $region51: #{forward_net_forward.1} parent=0 // pred_check_branch
    %45 = sbr.rel (0) target = $region53
  $region52: #{forward_net_forward.1} parent=0 // pred_region
    _
  $region53: #{forward_net_forward.1} parent=0 // pred_fallthru
    _
  // Predicated region
  $region54: #{forward_net_forward.1} parent=0 // pred_check
    _
  $region55: #{forward_net_forward.1} parent=0 // pred_check_branch
    %47 = sbr.rel (0) target = $region57
  $region56: #{forward_net_forward.1} parent=0 // pred_region
    _
  $region57: #{forward_net_forward.1} parent=0 // pred_fallthru
    _
  // Predicated region
  $region58: #{forward_net_forward.1} parent=0 // pred_check
    _
  $region59: #{forward_net_forward.1} parent=0 // pred_check_branch
    %49 = sbr.rel (0) target = $region61
  $region60: #{forward_net_forward.1} parent=0 // pred_region
    _
  $region61: #{forward_net_forward.1} parent=0 // pred_fallthru
    _
  %v50 = vld [vmem:[%s0] sm:$0xff]
  %v51 = vld [vmem:[%s0 + $0x8] sm:$0xff]
  %v52 = vld [vmem:[%s2] sm:$0xff]
  %v53 = vld [vmem:[%s2 + $0x8] sm:$0xf]
  %v54 = vld [vmem:[%s1] sm:$0xff]
  %v55 = vld [vmem:[%s1 + $0x8] sm:$0xff]
  %v56 = vld [vmem:[%s3] sm:$0xf]
  %vm57 = vcmask 31744
  %v59 = vsel %vm57, %v54, 0
  %v62 = vsel %vm57, %v55, 0
  %vm64 = vcmask 1043456
  %v66 = vsel %vm64, %v56, 0
  %68 = vmatprep.subr.mxu0 0.0
  %69 = vmatpush1.msra.mxu0 0.0
  %70 = vmatprep.subr.mxu0 0.0
  %71 = vmatpush1.msra.mxu0 0.0
  %72 = vmatprep.subr.mxu0 0.0
  %73 = vmatpush1.msra.mxu0 0.0
  %74 = vmatprep.subr.mxu0 0.0
  %75 = vmatpush1.msra.mxu0 0.0
  %76 = vmatprep.subr.mxu0 0.0
  %77 = vmatpush1.msra.mxu0 0.0
  %78 = vmatprep.subr.mxu0 0.0
  %79 = vmatpush1.msra.mxu0 0.0
  %80 = vmatprep.subr.mxu0 0.0
  %81 = vmatpush1.msra.mxu0 0.0
  %82 = vmatprep.subr.mxu0 0.0
  %83 = vmatpush1.msra.mxu0 0.0
  %84 = vmatprep.subr.mxu0 0.0
  %85 = vmatpush1.msra.mxu0 0.0
  %86 = vmatprep.subr.mxu0 0.0
  %87 = vmatpush1.msra.mxu0 0.0
  %88 = vmatprep.subr.mxu0 0.0
  %89 = vmatpush1.msra.mxu0 0.0
  %90 = vmatprep.subr.mxu0 0.0
  %91 = vmatpush1.msra.mxu0 0.0
  %92 = vmatprep.subr.mxu0 0.0
  %93 = vmatpush1.msra.mxu0 0.0
  %94 = vmatprep.subr.mxu0 0.0
  %95 = vmatpush1.msra.mxu0 0.0
  %96 = vmatprep.subr.mxu0 0.0
  %97 = vmatpush1.msra.mxu0 0.0
  %98 = vmatprep.subr.mxu0 0.0
  %99 = vmatpush1.msra.mxu0 %v66
  %100 = vmatprep.subr.mxu0 0.0
  %101 = vmatpush2.msra.mxu0 0.0
  %102 = vmatprep.subr.mxu0 0.0
  %103 = vmatpush2.msra.mxu0 0.0
  %104 = vmatprep.subr.mxu0 0.0
  %105 = vmatpush2.msra.mxu0 0.0
  %106 = vmatprep.subr.mxu0 0.0
  %107 = vmatpush2.msra.mxu0 0.0
  %108 = vmatprep.subr.mxu0 0.0
  %109 = vmatpush2.msra.mxu0 0.0
  %110 = vmatprep.subr.mxu0 0.0
  %111 = vmatpush2.msra.mxu0 0.0
  %112 = vmatprep.subr.mxu0 0.0
  %113 = vmatpush2.msra.mxu0 0.0
  %114 = vmatprep.subr.mxu0 0.0
  %115 = vmatpush2.msra.mxu0 0.0
  %116 = vmatprep.subr.mxu0 0.0
  %117 = vmatpush2.msra.mxu0 0.0
  %118 = vmatprep.subr.mxu0 0.0
  %119 = vmatpush2.msra.mxu0 0.0
  %120 = vmatprep.subr.mxu0 0.0
  %121 = vmatpush2.msra.mxu0 0.0
  %122 = vmatprep.subr.mxu0 0.0
  %123 = vmatpush2.msra.mxu0 0.0
  %124 = vmatprep.subr.mxu0 0.0
  %125 = vmatpush2.msra.mxu0 0.0
  %126 = vmatprep.subr.mxu0 0.0
  %127 = vmatpush2.msra.mxu0 0.0
  %128 = vmatprep.subr.mxu0 0.0
  %129 = vmatpush2.msra.mxu0 0.0
  %130 = vmatprep.subr.mxu0 0.0
  %131 = vmatpush2.msra.mxu0 0.0
  %132 = vmatprep.mubr.f32.mxu0 0.0
  %133 = vmatmul.mubr.f32.gmra.mxu0 %v59
  %v134 = vpop.f32.mrf.mxu0
  %v135 = vadd.f32 0.0, %v134
  %v136 = vpop.f32.mrf.mxu0
  %137 = vmatprep.mubr.f32.mxu0 0.0
  %138 = vmatmul.mubr.f32.gmra.mxu0 %v62
  %v139 = vpop.f32.mrf.mxu0
  %v140 = vadd.f32 0.0, %v139
  %v141 = vpop.f32.mrf.mxu0
  %142 = vdwg.mxu0
  %vm143 = vcmask 97280
  %v145 = vsel %vm143, %v50, 0
  %v148 = vsel %vm143, %v51, 0
  %v151 = vsel %vm64, %v53, 0
  %153 = vmatprep.subr.mxu0 0.0
  %154 = vmatpush1.msra.mxu0 0.0
  %155 = vmatprep.subr.mxu0 0.0
  %156 = vmatpush1.msra.mxu0 0.0
  %157 = vmatprep.subr.mxu0 0.0
  %158 = vmatpush1.msra.mxu0 0.0
  %159 = vmatprep.subr.mxu0 0.0
  %160 = vmatpush1.msra.mxu0 0.0
  %161 = vmatprep.subr.mxu0 0.0
  %162 = vmatpush1.msra.mxu0 0.0
  %163 = vmatprep.subr.mxu0 0.0
  %164 = vmatpush1.msra.mxu0 0.0
  %165 = vmatprep.subr.mxu0 0.0
  %166 = vmatpush1.msra.mxu0 0.0
  %167 = vmatprep.subr.mxu0 0.0
  %168 = vmatpush1.msra.mxu0 0.0
  %169 = vmatprep.subr.mxu0 0.0
  %170 = vmatpush1.msra.mxu0 0.0
  %171 = vmatprep.subr.mxu0 0.0
  %172 = vmatpush1.msra.mxu0 0.0
  %173 = vmatprep.subr.mxu0 0.0
  %174 = vmatpush1.msra.mxu0 0.0
  %175 = vmatprep.subr.mxu0 0.0
  %176 = vmatpush1.msra.mxu0 0.0
  %177 = vmatprep.subr.mxu0 0.0
  %178 = vmatpush1.msra.mxu0 0.0
  %179 = vmatprep.subr.mxu0 0.0
  %180 = vmatpush1.msra.mxu0 0.0
  %181 = vmatprep.subr.mxu0 0.0
  %182 = vmatpush1.msra.mxu0 %v151
  %183 = vmatprep.subr.mxu0 0.0
  %184 = vmatpush1.msra.mxu0 %v52
  %185 = vmatprep.subr.mxu0 0.0
  %186 = vmatpush2.msra.mxu0 0.0
  %187 = vmatprep.subr.mxu0 0.0
  %188 = vmatpush2.msra.mxu0 0.0
  %189 = vmatprep.subr.mxu0 0.0
  %190 = vmatpush2.msra.mxu0 0.0
  %191 = vmatprep.subr.mxu0 0.0
  %192 = vmatpush2.msra.mxu0 0.0
  %193 = vmatprep.subr.mxu0 0.0
  %194 = vmatpush2.msra.mxu0 0.0
  %195 = vmatprep.subr.mxu0 0.0
  %196 = vmatpush2.msra.mxu0 0.0
  %197 = vmatprep.subr.mxu0 0.0
  %198 = vmatpush2.msra.mxu0 0.0
  %199 = vmatprep.subr.mxu0 0.0
  %200 = vmatpush2.msra.mxu0 0.0
  %201 = vmatprep.subr.mxu0 0.0
  %202 = vmatpush2.msra.mxu0 0.0
  %203 = vmatprep.subr.mxu0 0.0
  %204 = vmatpush2.msra.mxu0 0.0
  %205 = vmatprep.subr.mxu0 0.0
  %206 = vmatpush2.msra.mxu0 0.0
  %207 = vmatprep.subr.mxu0 0.0
  %208 = vmatpush2.msra.mxu0 0.0
  %209 = vmatprep.subr.mxu0 0.0
  %210 = vmatpush2.msra.mxu0 0.0
  %211 = vmatprep.subr.mxu0 0.0
  %212 = vmatpush2.msra.mxu0 0.0
  %213 = vmatprep.subr.mxu0 0.0
  %214 = vmatpush2.msra.mxu0 0.0
  %215 = vmatprep.subr.mxu0 0.0
  %216 = vmatpush2.msra.mxu0 0.0
  %217 = vmatprep.mubr.f32.mxu0 0.0
  %218 = vmatmul.mubr.f32.gmra.mxu0 %v145
  %v219 = vpop.f32.mrf.mxu0
  %v220 = vadd.f32 %v135, %v219
  %v221 = vpop.f32.mrf.mxu0
  %222 = vmatprep.mubr.f32.mxu0 0.0
  %223 = vmatmul.mubr.f32.gmra.mxu0 %v148
  %v224 = vpop.f32.mrf.mxu0
  %v225 = vadd.f32 %v140, %v224
  %v226 = vpop.f32.mrf.mxu0
  %227 = vdwg.mxu0
  %v228 = vld [vmem:[%s4] sm:$0x1]
  %v230 = vlaneseq
  %v231 = vshrl.u32 %v230, 7
  %v232 = vsub.s32 0, %v231
  %v233 = vrot.slane %v228, %v232
  %v235 = vadd.f32 %v220, %v233
  %v236 = vadd.f32 %v225, %v233
  %v237 = vxor.u32 %v235, 2147483648
  %v238 = vxor.u32 %v236, 2147483648
  %v239 = vmul.f32 %v237, 1.442695
  %v240 = vpow.pop %v239
  %v241 = vmul.f32 %v238, 1.442695
  %v242 = vpow.pop %v241
  %v243 = vadd.f32 %v240, 1.0
  %v244 = vadd.f32 %v242, 1.0
  %v245 = vrcp.pop %v243
  %v246 = vmul.f32 1.0, %v245
  %v247 = vrcp.pop %v244
  %v248 = vmul.f32 1.0, %v247
  %v249 = vmul.f32 %v235, %v246
  %v250 = vmul.f32 %v236, %v248
  %v251 = vld [vmem:[%s5] sm:$0xff]
  %v252 = vld [vmem:[%s5 + $0x8] sm:$0xff]
  %v253 = vld [vmem:[%s5 + $0x10] sm:$0xff]
  %v254 = vld [vmem:[%s5 + $0x18] sm:$0xff]
  %v255 = vld [vmem:[%s6] sm:$0x1]
  %v257 = vlaneseq
  %v258 = vshrl.u32 %v257, 7
  %v259 = vsub.s32 0, %v258
  %v260 = vrot.slane %v255, %v259
  %vm262 = vcmask 261120
  %v264 = vsel %vm262, %v249, 0
  %v267 = vsel %vm262, %v250, 0
  %269 = vmatprep.subr.mxu0 0.0
  %270 = vmatpush1.msra.mxu0 0.0
  %271 = vmatprep.subr.mxu0 0.0
  %272 = vmatpush1.msra.mxu0 0.0
  %273 = vmatprep.subr.mxu0 0.0
  %274 = vmatpush1.msra.mxu0 0.0
  %275 = vmatprep.subr.mxu0 0.0
  %276 = vmatpush1.msra.mxu0 0.0
  %277 = vmatprep.subr.mxu0 0.0
  %278 = vmatpush1.msra.mxu0 0.0
  %279 = vmatprep.subr.mxu0 0.0
  %280 = vmatpush1.msra.mxu0 0.0
  %281 = vmatprep.subr.mxu0 0.0
  %282 = vmatpush1.msra.mxu0 0.0
  %283 = vmatprep.subr.mxu0 0.0
  %284 = vmatpush1.msra.mxu0 0.0
  %285 = vmatprep.subr.mxu0 0.0
  %286 = vmatpush1.msra.mxu0 0.0
  %287 = vmatprep.subr.mxu0 0.0
  %288 = vmatpush1.msra.mxu0 0.0
  %289 = vmatprep.subr.mxu0 0.0
  %290 = vmatpush1.msra.mxu0 0.0
  %291 = vmatprep.subr.mxu0 0.0
  %292 = vmatpush1.msra.mxu0 0.0
  %293 = vmatprep.subr.mxu0 0.0
  %294 = vmatpush1.msra.mxu0 %v254
  %295 = vmatprep.subr.mxu0 0.0
  %296 = vmatpush1.msra.mxu0 %v253
  %297 = vmatprep.subr.mxu0 0.0
  %298 = vmatpush1.msra.mxu0 %v252
  %299 = vmatprep.subr.mxu0 0.0
  %300 = vmatpush1.msra.mxu0 %v251
  %301 = vmatprep.subr.mxu0 0.0
  %302 = vmatpush2.msra.mxu0 0.0
  %303 = vmatprep.subr.mxu0 0.0
  %304 = vmatpush2.msra.mxu0 0.0
  %305 = vmatprep.subr.mxu0 0.0
  %306 = vmatpush2.msra.mxu0 0.0
  %307 = vmatprep.subr.mxu0 0.0
  %308 = vmatpush2.msra.mxu0 0.0
  %309 = vmatprep.subr.mxu0 0.0
  %310 = vmatpush2.msra.mxu0 0.0
  %311 = vmatprep.subr.mxu0 0.0
  %312 = vmatpush2.msra.mxu0 0.0
  %313 = vmatprep.subr.mxu0 0.0
  %314 = vmatpush2.msra.mxu0 0.0
  %315 = vmatprep.subr.mxu0 0.0
  %316 = vmatpush2.msra.mxu0 0.0
  %317 = vmatprep.subr.mxu0 0.0
  %318 = vmatpush2.msra.mxu0 0.0
  %319 = vmatprep.subr.mxu0 0.0
  %320 = vmatpush2.msra.mxu0 0.0
  %321 = vmatprep.subr.mxu0 0.0
  %322 = vmatpush2.msra.mxu0 0.0
  %323 = vmatprep.subr.mxu0 0.0
  %324 = vmatpush2.msra.mxu0 0.0
  %325 = vmatprep.subr.mxu0 0.0
  %326 = vmatpush2.msra.mxu0 0.0
  %327 = vmatprep.subr.mxu0 0.0
  %328 = vmatpush2.msra.mxu0 0.0
  %329 = vmatprep.subr.mxu0 0.0
  %330 = vmatpush2.msra.mxu0 0.0
  %331 = vmatprep.subr.mxu0 0.0
  %332 = vmatpush2.msra.mxu0 0.0
  %333 = vmatprep.mubr.f32.mxu0 0.0
  %334 = vmatmul.mubr.f32.gmra.mxu0 %v264
  %v335 = vpop.f32.mrf.mxu0
  %v336 = vadd.f32 %v260, %v335
  %v337 = vpop.f32.mrf.mxu0
  %338 = vmatprep.mubr.f32.mxu0 0.0
  %339 = vmatmul.mubr.f32.gmra.mxu0 %v267
  %v340 = vpop.f32.mrf.mxu0
  %v341 = vadd.f32 %v260, %v340
  %v342 = vpop.f32.mrf.mxu0
  %343 = vdwg.mxu0
  %v344 = vxor.u32 %v336, 2147483648
  %v345 = vxor.u32 %v341, 2147483648
  %v346 = vmul.f32 %v344, 1.442695
  %v347 = vpow.pop %v346
  %v348 = vmul.f32 %v345, 1.442695
  %v349 = vpow.pop %v348
  %v350 = vadd.f32 %v347, 1.0
  %v351 = vadd.f32 %v349, 1.0
  %v352 = vrcp.pop %v350
  %v353 = vmul.f32 1.0, %v352
  %v354 = vrcp.pop %v351
  %v355 = vmul.f32 1.0, %v354
  %v356 = vmul.f32 %v336, %v353
  %v357 = vmul.f32 %v341, %v355
  %v358 = vld [vmem:[%s7] sm:$0xff]
  %v359 = vld [vmem:[%s7 + $0x8] sm:$0xff]
  %v360 = vld [vmem:[%s7 + $0x10] sm:$0xff]
  %v361 = vld [vmem:[%s7 + $0x18] sm:$0xff]
  %v362 = vld [vmem:[%s8] sm:$0x1]
  %v364 = vlaneseq
  %v365 = vshrl.u32 %v364, 7
  %v366 = vsub.s32 0, %v365
  %v367 = vrot.slane %v362, %v366
  %v370 = vsel %vm262, %v356, 0
  %v373 = vsel %vm262, %v357, 0
  %375 = vmatprep.subr.mxu0 0.0
  %376 = vmatpush1.msra.mxu0 0.0
  %377 = vmatprep.subr.mxu0 0.0
  %378 = vmatpush1.msra.mxu0 0.0
  %379 = vmatprep.subr.mxu0 0.0
  %380 = vmatpush1.msra.mxu0 0.0
  %381 = vmatprep.subr.mxu0 0.0
  %382 = vmatpush1.msra.mxu0 0.0
  %383 = vmatprep.subr.mxu0 0.0
  %384 = vmatpush1.msra.mxu0 0.0
  %385 = vmatprep.subr.mxu0 0.0
  %386 = vmatpush1.msra.mxu0 0.0
  %387 = vmatprep.subr.mxu0 0.0
  %388 = vmatpush1.msra.mxu0 0.0
  %389 = vmatprep.subr.mxu0 0.0
  %390 = vmatpush1.msra.mxu0 0.0
  %391 = vmatprep.subr.mxu0 0.0
  %392 = vmatpush1.msra.mxu0 0.0
  %393 = vmatprep.subr.mxu0 0.0
  %394 = vmatpush1.msra.mxu0 0.0
  %395 = vmatprep.subr.mxu0 0.0
  %396 = vmatpush1.msra.mxu0 0.0
  %397 = vmatprep.subr.mxu0 0.0
  %398 = vmatpush1.msra.mxu0 0.0
  %399 = vmatprep.subr.mxu0 0.0
  %400 = vmatpush1.msra.mxu0 %v361
  %401 = vmatprep.subr.mxu0 0.0
  %402 = vmatpush1.msra.mxu0 %v360
  %403 = vmatprep.subr.mxu0 0.0
  %404 = vmatpush1.msra.mxu0 %v359
  %405 = vmatprep.subr.mxu0 0.0
  %406 = vmatpush1.msra.mxu0 %v358
  %407 = vmatprep.subr.mxu0 0.0
  %408 = vmatpush2.msra.mxu0 0.0
  %409 = vmatprep.subr.mxu0 0.0
  %410 = vmatpush2.msra.mxu0 0.0
  %411 = vmatprep.subr.mxu0 0.0
  %412 = vmatpush2.msra.mxu0 0.0
  %413 = vmatprep.subr.mxu0 0.0
  %414 = vmatpush2.msra.mxu0 0.0
  %415 = vmatprep.subr.mxu0 0.0
  %416 = vmatpush2.msra.mxu0 0.0
  %417 = vmatprep.subr.mxu0 0.0
  %418 = vmatpush2.msra.mxu0 0.0
  %419 = vmatprep.subr.mxu0 0.0
  %420 = vmatpush2.msra.mxu0 0.0
  %421 = vmatprep.subr.mxu0 0.0
  %422 = vmatpush2.msra.mxu0 0.0
  %423 = vmatprep.subr.mxu0 0.0
  %424 = vmatpush2.msra.mxu0 0.0
  %425 = vmatprep.subr.mxu0 0.0
  %426 = vmatpush2.msra.mxu0 0.0
  %427 = vmatprep.subr.mxu0 0.0
  %428 = vmatpush2.msra.mxu0 0.0
  %429 = vmatprep.subr.mxu0 0.0
  %430 = vmatpush2.msra.mxu0 0.0
  %431 = vmatprep.subr.mxu0 0.0
  %432 = vmatpush2.msra.mxu0 0.0
  %433 = vmatprep.subr.mxu0 0.0
  %434 = vmatpush2.msra.mxu0 0.0
  %435 = vmatprep.subr.mxu0 0.0
  %436 = vmatpush2.msra.mxu0 0.0
  %437 = vmatprep.subr.mxu0 0.0
  %438 = vmatpush2.msra.mxu0 0.0
  %439 = vmatprep.mubr.f32.mxu0 0.0
  %440 = vmatmul.mubr.f32.gmra.mxu0 %v370
  %v441 = vpop.f32.mrf.mxu0
  %v442 = vadd.f32 %v367, %v441
  %v443 = vpop.f32.mrf.mxu0
  %444 = vmatprep.mubr.f32.mxu0 0.0
  %445 = vmatmul.mubr.f32.gmra.mxu0 %v373
  %v446 = vpop.f32.mrf.mxu0
  %v447 = vadd.f32 %v367, %v446
  %v448 = vpop.f32.mrf.mxu0
  %449 = vdwg.mxu0
  %v450 = vxor.u32 %v442, 2147483648
  %v451 = vxor.u32 %v447, 2147483648
  %v452 = vmul.f32 %v450, 1.442695
  %v453 = vpow.pop %v452
  %v454 = vmul.f32 %v451, 1.442695
  %v455 = vpow.pop %v454
  %v456 = vadd.f32 %v453, 1.0
  %v457 = vadd.f32 %v455, 1.0
  %v458 = vrcp.pop %v456
  %v459 = vmul.f32 1.0, %v458
  %v460 = vrcp.pop %v457
  %v461 = vmul.f32 1.0, %v460
  %v462 = vmul.f32 %v442, %v459
  %v463 = vmul.f32 %v447, %v461
  %v464 = vld [vmem:[%s9] sm:$0xff]
  %v465 = vld [vmem:[%s9 + $0x8] sm:$0xff]
  %v466 = vld [vmem:[%s9 + $0x10] sm:$0xff]
  %v467 = vld [vmem:[%s9 + $0x18] sm:$0xff]
  %v468 = vld [vmem:[%s10] sm:$0x1]
  %v470 = vlaneseq
  %v471 = vshrl.u32 %v470, 7
  %v472 = vsub.s32 0, %v471
  %v473 = vrot.slane %v468, %v472
  %v476 = vsel %vm262, %v462, 0
  %v479 = vsel %vm262, %v463, 0
  %481 = vmatprep.subr.mxu0 0.0
  %482 = vmatpush1.msra.mxu0 0.0
  %483 = vmatprep.subr.mxu0 0.0
  %484 = vmatpush1.msra.mxu0 0.0
  %485 = vmatprep.subr.mxu0 0.0
  %486 = vmatpush1.msra.mxu0 0.0
  %487 = vmatprep.subr.mxu0 0.0
  %488 = vmatpush1.msra.mxu0 0.0
  %489 = vmatprep.subr.mxu0 0.0
  %490 = vmatpush1.msra.mxu0 0.0
  %491 = vmatprep.subr.mxu0 0.0
  %492 = vmatpush1.msra.mxu0 0.0
  %493 = vmatprep.subr.mxu0 0.0
  %494 = vmatpush1.msra.mxu0 0.0
  %495 = vmatprep.subr.mxu0 0.0
  %496 = vmatpush1.msra.mxu0 0.0
  %497 = vmatprep.subr.mxu0 0.0
  %498 = vmatpush1.msra.mxu0 0.0
  %499 = vmatprep.subr.mxu0 0.0
  %500 = vmatpush1.msra.mxu0 0.0
  %501 = vmatprep.subr.mxu0 0.0
  %502 = vmatpush1.msra.mxu0 0.0
  %503 = vmatprep.subr.mxu0 0.0
  %504 = vmatpush1.msra.mxu0 0.0
  %505 = vmatprep.subr.mxu0 0.0
  %506 = vmatpush1.msra.mxu0 %v467
  %507 = vmatprep.subr.mxu0 0.0
  %508 = vmatpush1.msra.mxu0 %v466
  %509 = vmatprep.subr.mxu0 0.0
  %510 = vmatpush1.msra.mxu0 %v465
  %511 = vmatprep.subr.mxu0 0.0
  %512 = vmatpush1.msra.mxu0 %v464
  %513 = vmatprep.subr.mxu0 0.0
  %514 = vmatpush2.msra.mxu0 0.0
  %515 = vmatprep.subr.mxu0 0.0
  %516 = vmatpush2.msra.mxu0 0.0
  %517 = vmatprep.subr.mxu0 0.0
  %518 = vmatpush2.msra.mxu0 0.0
  %519 = vmatprep.subr.mxu0 0.0
  %520 = vmatpush2.msra.mxu0 0.0
  %521 = vmatprep.subr.mxu0 0.0
  %522 = vmatpush2.msra.mxu0 0.0
  %523 = vmatprep.subr.mxu0 0.0
  %524 = vmatpush2.msra.mxu0 0.0
  %525 = vmatprep.subr.mxu0 0.0
  %526 = vmatpush2.msra.mxu0 0.0
  %527 = vmatprep.subr.mxu0 0.0
  %528 = vmatpush2.msra.mxu0 0.0
  %529 = vmatprep.subr.mxu0 0.0
  %530 = vmatpush2.msra.mxu0 0.0
  %531 = vmatprep.subr.mxu0 0.0
  %532 = vmatpush2.msra.mxu0 0.0
  %533 = vmatprep.subr.mxu0 0.0
  %534 = vmatpush2.msra.mxu0 0.0
  %535 = vmatprep.subr.mxu0 0.0
  %536 = vmatpush2.msra.mxu0 0.0
  %537 = vmatprep.subr.mxu0 0.0
  %538 = vmatpush2.msra.mxu0 0.0
  %539 = vmatprep.subr.mxu0 0.0
  %540 = vmatpush2.msra.mxu0 0.0
  %541 = vmatprep.subr.mxu0 0.0
  %542 = vmatpush2.msra.mxu0 0.0
  %543 = vmatprep.subr.mxu0 0.0
  %544 = vmatpush2.msra.mxu0 0.0
  %545 = vmatprep.mubr.f32.mxu0 0.0
  %546 = vmatmul.mubr.f32.gmra.mxu0 %v476
  %v547 = vpop.f32.mrf.mxu0
  %v548 = vadd.f32 %v473, %v547
  %v549 = vpop.f32.mrf.mxu0
  %550 = vmatprep.mubr.f32.mxu0 0.0
  %551 = vmatmul.mubr.f32.gmra.mxu0 %v479
  %v552 = vpop.f32.mrf.mxu0
  %v553 = vadd.f32 %v473, %v552
  %v554 = vpop.f32.mrf.mxu0
  %555 = vdwg.mxu0
  %v556 = vxor.u32 %v548, 2147483648
  %v557 = vxor.u32 %v553, 2147483648
  %v558 = vmul.f32 %v556, 1.442695
  %v559 = vpow.pop %v558
  %v560 = vmul.f32 %v557, 1.442695
  %v561 = vpow.pop %v560
  %v562 = vadd.f32 %v559, 1.0
  %v563 = vadd.f32 %v561, 1.0
  %v564 = vrcp.pop %v562
  %v565 = vmul.f32 1.0, %v564
  %v566 = vrcp.pop %v563
  %v567 = vmul.f32 1.0, %v566
  %v568 = vmul.f32 %v548, %v565
  %v569 = vmul.f32 %v553, %v567
  %v570 = vld [vmem:[%s11] sm:$0xff]
  %v571 = vld [vmem:[%s11 + $0x8] sm:$0xff]
  %v572 = vld [vmem:[%s11 + $0x10] sm:$0xff]
  %v573 = vld [vmem:[%s11 + $0x18] sm:$0xff]
  %v574 = vld [vmem:[%s12] sm:$0x1]
  %v576 = vlaneseq
  %v577 = vshrl.u32 %v576, 7
  %v578 = vsub.s32 0, %v577
  %v579 = vrot.slane %v574, %v578
  %v582 = vsel %vm262, %v568, 0
  %v585 = vsel %vm262, %v569, 0
  %587 = vmatprep.subr.mxu0 0.0
  %588 = vmatpush1.msra.mxu0 0.0
  %589 = vmatprep.subr.mxu0 0.0
  %590 = vmatpush1.msra.mxu0 0.0
  %591 = vmatprep.subr.mxu0 0.0
  %592 = vmatpush1.msra.mxu0 0.0
  %593 = vmatprep.subr.mxu0 0.0
  %594 = vmatpush1.msra.mxu0 0.0
  %595 = vmatprep.subr.mxu0 0.0
  %596 = vmatpush1.msra.mxu0 0.0
  %597 = vmatprep.subr.mxu0 0.0
  %598 = vmatpush1.msra.mxu0 0.0
  %599 = vmatprep.subr.mxu0 0.0
  %600 = vmatpush1.msra.mxu0 0.0
  %601 = vmatprep.subr.mxu0 0.0
  %602 = vmatpush1.msra.mxu0 0.0
  %603 = vmatprep.subr.mxu0 0.0
  %604 = vmatpush1.msra.mxu0 0.0
  %605 = vmatprep.subr.mxu0 0.0
  %606 = vmatpush1.msra.mxu0 0.0
  %607 = vmatprep.subr.mxu0 0.0
  %608 = vmatpush1.msra.mxu0 0.0
  %609 = vmatprep.subr.mxu0 0.0
  %610 = vmatpush1.msra.mxu0 0.0
  %611 = vmatprep.subr.mxu0 0.0
  %612 = vmatpush1.msra.mxu0 %v573
  %613 = vmatprep.subr.mxu0 0.0
  %614 = vmatpush1.msra.mxu0 %v572
  %615 = vmatprep.subr.mxu0 0.0
  %616 = vmatpush1.msra.mxu0 %v571
  %617 = vmatprep.subr.mxu0 0.0
  %618 = vmatpush1.msra.mxu0 %v570
  %619 = vmatprep.subr.mxu0 0.0
  %620 = vmatpush2.msra.mxu0 0.0
  %621 = vmatprep.subr.mxu0 0.0
  %622 = vmatpush2.msra.mxu0 0.0
  %623 = vmatprep.subr.mxu0 0.0
  %624 = vmatpush2.msra.mxu0 0.0
  %625 = vmatprep.subr.mxu0 0.0
  %626 = vmatpush2.msra.mxu0 0.0
  %627 = vmatprep.subr.mxu0 0.0
  %628 = vmatpush2.msra.mxu0 0.0
  %629 = vmatprep.subr.mxu0 0.0
  %630 = vmatpush2.msra.mxu0 0.0
  %631 = vmatprep.subr.mxu0 0.0
  %632 = vmatpush2.msra.mxu0 0.0
  %633 = vmatprep.subr.mxu0 0.0
  %634 = vmatpush2.msra.mxu0 0.0
  %635 = vmatprep.subr.mxu0 0.0
  %636 = vmatpush2.msra.mxu0 0.0
  %637 = vmatprep.subr.mxu0 0.0
  %638 = vmatpush2.msra.mxu0 0.0
  %639 = vmatprep.subr.mxu0 0.0
  %640 = vmatpush2.msra.mxu0 0.0
  %641 = vmatprep.subr.mxu0 0.0
  %642 = vmatpush2.msra.mxu0 0.0
  %643 = vmatprep.subr.mxu0 0.0
  %644 = vmatpush2.msra.mxu0 0.0
  %645 = vmatprep.subr.mxu0 0.0
  %646 = vmatpush2.msra.mxu0 0.0
  %647 = vmatprep.subr.mxu0 0.0
  %648 = vmatpush2.msra.mxu0 0.0
  %649 = vmatprep.subr.mxu0 0.0
  %650 = vmatpush2.msra.mxu0 0.0
  %651 = vmatprep.mubr.f32.mxu0 0.0
  %652 = vmatmul.mubr.f32.gmra.mxu0 %v582
  %v653 = vpop.f32.mrf.mxu0
  %v654 = vadd.f32 %v579, %v653
  %v655 = vpop.f32.mrf.mxu0
  %656 = vmatprep.mubr.f32.mxu0 0.0
  %657 = vmatmul.mubr.f32.gmra.mxu0 %v585
  %v658 = vpop.f32.mrf.mxu0
  %v659 = vadd.f32 %v579, %v658
  %v660 = vpop.f32.mrf.mxu0
  %661 = vdwg.mxu0
  %v662 = vld [vmem:[%s13] sm:$0x1]
  %v663 = vld [vmem:[%s14] sm:$0x1]
  %v665 = vlaneseq
  %v666 = vshrl.u32 %v665, 7
  %v667 = vsub.s32 0, %v666
  %v668 = vrot.slane %v662, %v667
  %v670 = vsub.f32 %v668, %v654
  %v671 = vsub.f32 %v668, %v659
  %v672 = vmax.f32 %v670, 0.0
  %v673 = vmax.f32 %v671, 0.0
  %v674 = vand.u32 2147483647, %v670
  %v675 = vand.u32 2147483647, %v671
  %v676 = vsub.f32 0.0, %v674
  %v677 = vsub.f32 0.0, %v675
  %v678 = vmul.f32 %v676, 1.442695
  %v679 = vpow.pop %v678
  %v680 = vmul.f32 %v677, 1.442695
  %v681 = vpow.pop %v680
  %v682 = vadd.f32 %v679, 1.0
  %v683 = vlog2.pop %v682
  %v684 = vmul.f32 %v683, 0.6931472
  %v685 = vmul.f32 -0.5, %v679
  %v686 = vadd.f32 %v685, 1.0
  %v687 = vmul.f32 %v686, %v679
  %v688 = vand.u32 2147483647, %v679
  %vm689 = vcmp.lt.f32.partialorder %v688, 0.0004427343
  %v690 = vsel %vm689, %v687, %v684
  %v691 = vadd.f32 %v681, 1.0
  %v692 = vlog2.pop %v691
  %v693 = vmul.f32 %v692, 0.6931472
  %v694 = vmul.f32 -0.5, %v681
  %v695 = vadd.f32 %v694, 1.0
  %v696 = vmul.f32 %v695, %v681
  %v697 = vand.u32 2147483647, %v681
  %vm698 = vcmp.lt.f32.partialorder %v697, 0.0004427343
  %v699 = vsel %vm698, %v696, %v693
  %v700 = vadd.f32 %v672, %v690
  %v701 = vadd.f32 %v673, %v699
  %v702 = vsub.f32 %v668, %v700
  %v703 = vsub.f32 %v668, %v701
  %v705 = vlaneseq
  %v706 = vshrl.u32 %v705, 7
  %v707 = vsub.s32 0, %v706
  %v708 = vrot.slane %v663, %v707
  %v710 = vsub.f32 %v702, %v708
  %v711 = vsub.f32 %v703, %v708
  %v712 = vmax.f32 %v710, 0.0
  %v713 = vmax.f32 %v711, 0.0
  %v714 = vand.u32 2147483647, %v710
  %v715 = vand.u32 2147483647, %v711
  %v716 = vsub.f32 0.0, %v714
  %v717 = vsub.f32 0.0, %v715
  %v718 = vmul.f32 %v716, 1.442695
  %v719 = vpow.pop %v718
  %v720 = vmul.f32 %v717, 1.442695
  %v721 = vpow.pop %v720
  %v722 = vadd.f32 %v719, 1.0
  %v723 = vlog2.pop %v722
  %v724 = vmul.f32 %v723, 0.6931472
  %v725 = vmul.f32 -0.5, %v719
  %v726 = vadd.f32 %v725, 1.0
  %v727 = vmul.f32 %v726, %v719
  %v728 = vand.u32 2147483647, %v719
  %vm729 = vcmp.lt.f32.partialorder %v728, 0.0004427343
  %v730 = vsel %vm729, %v727, %v724
  %v731 = vadd.f32 %v721, 1.0
  %v732 = vlog2.pop %v731
  %v733 = vmul.f32 %v732, 0.6931472
  %v734 = vmul.f32 -0.5, %v721
  %v735 = vadd.f32 %v734, 1.0
  %v736 = vmul.f32 %v735, %v721
  %v737 = vand.u32 2147483647, %v721
  %vm738 = vcmp.lt.f32.partialorder %v737, 0.0004427343
  %v739 = vsel %vm738, %v736, %v733
  %v740 = vadd.f32 %v712, %v730
  %v741 = vadd.f32 %v713, %v739
  %v742 = vadd.f32 %v708, %v740
  %v743 = vadd.f32 %v708, %v741
  %v744 = vlaneseq
  %v745 = vand.u32 %v744, 127
  %vm746 = vcmp.ge.s32.totalorder %v745, 12
  %v747 = vsel %vm746, %v742, %v654
  %v748 = vsel %vm746, %v743, %v659
  %749 = vst [vmem:[%s15] sm:$0xff] %v747
  %750 = vst [vmem:[%s15 + $0x8] sm:$0xff] %v748
  // Predicated region
  $region62: #{forward_net_forward.1} parent=0 // pred_check
    _
  $region63: #{forward_net_forward.1} parent=0 // pred_check_branch
    %752 = sbr.rel (0) target = $region65
  $region64: #{forward_net_forward.1} parent=0 // pred_region
    _
  $region65: #{forward_net_forward.1} parent=0 // pred_fallthru
    _
  // Predicated region
  $region66: #{forward_net_forward.1} parent=0 // pred_check
    _
  $region67: #{forward_net_forward.1} parent=0 // pred_check_branch
    %754 = sbr.rel (0) target = $region69
  $region68: #{forward_net_forward.1} parent=0 // pred_region
    _
  $region69: #{forward_net_forward.1} parent=0 // pred_fallthru
    _

</llo_original>
